<compile_context>
chip_gen: v7x
topology: tpu7x:2x2x1
jax: 0.10.0
libtpu: 0.0.40
codegen_flags: <defaults>
</compile_context>

<pallas_src>
import math

import jax
import jax.numpy as jnp
from jax.experimental import pallas as pl
from jax.experimental.pallas import tpu as pltpu


# ----------------------------------------------------------------------------
# Kernels
# ----------------------------------------------------------------------------
def _pe_add_kernel(x_ref, pe_ref, o_ref):
    # x_ref/o_ref: (TILE_B, TILE_C); pe_ref: (1, TILE_C) broadcast over rows.
    o_ref[...] = (x_ref[...] + pe_ref[...]).astype(o_ref.dtype)


def _pe_add_dropout_kernel(x_ref, pe_ref, m_ref, o_ref):
    # m_ref holds 0.0 (dropped) or 1/(1-p) (kept): one VPU multiply, no select.
    o_ref[...] = ((x_ref[...] + pe_ref[...]) * m_ref[...]).astype(o_ref.dtype)


# ----------------------------------------------------------------------------
# Parameter (buffer) construction — mirrors the PyTorch __init__ exactly.
# ----------------------------------------------------------------------------
def make_positional_encoding(seq_length: int, d_model: int) -> jnp.ndarray:
    position = jnp.arange(0, seq_length, dtype=jnp.float32)[:, None]           # (S, 1)
    div_term = jnp.exp(jnp.arange(0, d_model, 2, dtype=jnp.float32)
                       * (-math.log(10000.0) / d_model))                       # (D/2,)
    pe = jnp.zeros((seq_length, d_model), dtype=jnp.float32)
    pe = pe.at[:, 0::2].set(jnp.sin(position * div_term))
    pe = pe.at[:, 1::2].set(jnp.cos(position * div_term))
    return pe                                                                   # (S, D)


def flatten_pe(pe: jnp.ndarray, seq_len: int, dtype) -> jnp.ndarray:
    """Precompute the lane-dense (1, S*D) pe view once (avoids a per-call
    slice/cast launch for latency-bound invocations)."""
    s, d = pe.shape[0], pe.shape[1]
    assert seq_len <= s
    return pe[:seq_len, :].reshape(1, seq_len * d).astype(dtype)


# ----------------------------------------------------------------------------
# Tiling helpers
# ----------------------------------------------------------------------------
def _round_up(x: int, m: int) -> int:
    return ((x + m - 1) // m) * m


def _sublane_multiple(dtype) -> int:
    itemsize = jnp.dtype(dtype).itemsize
    if itemsize >= 4:
        return 8
    if itemsize == 2:
        return 16
    return 32


def _block_budget_bytes() -> int:
    """Generation-aware per-tile budget.  ~vmem/12 so that double-buffered
    x (+mask) + out + pe fits comfortably: ~5 MiB/tile on v7x (64 MiB VMEM),
    ~10 MiB on v5e/v6e (128 MiB), capped at 16 MiB."""
    vmem = None
    try:
        info = pltpu.get_tpu_info()
        vmem = getattr(info, "vmem_capacity_bytes", None)
    except Exception:
        vmem = None
    if not vmem:
        vmem = 64 << 20  # conservative: v7x per-TC VMEM
    return int(max(1 << 20, min(16 << 20, vmem // 12)))


def _choose_tiles(B: int, C: int, dtype, budget_bytes: int):
    itemsize = jnp.dtype(dtype).itemsize
    sub = _sublane_multiple(dtype)
    max_elems = max(sub * 128, budget_bytes // itemsize)

    if C <= max_elems:
        # Full rows: each block is a contiguous HBM slab (best DMA efficiency).
        tile_c = C
        rows_budget = max(1, max_elems // C)
        if B <= rows_budget:
            tile_b = B
        else:
            tile_b = max(sub, (rows_budget // sub) * sub)
            if tile_b >= B:
                tile_b = B
    else:
        # A single row exceeds the budget: split along the lane axis.
        tile_b = min(B, sub)
        lanes_budget = max(128, max_elems // max(tile_b, 1))
        tile_c = min(_round_up(C, 128), (lanes_budget // 128) * 128)

    # v7x has 2 TensorCores: make sure a "parallel" axis has >= 2 steps for
    # non-trivial inputs so both cores get work (harmless on v5e/v6e).
    total_bytes = B * C * itemsize
    if (pl.cdiv(B, tile_b) * pl.cdiv(C, tile_c) == 1
            and total_bytes >= (512 << 10) and B >= 2 * sub):
        tile_b = _round_up(pl.cdiv(B, 2), sub)

    return tile_b, tile_c


# ----------------------------------------------------------------------------
# Wrapper
# ----------------------------------------------------------------------------
def positional_encoding_forward(x, pe, *, dropout_p=0.0, training=False,
                                rng_key=None, donate_x=False,
                                block_budget_bytes=None):
    """x: (B, S, D).  pe: (S_full, D) with S_full >= S, or a pre-flattened
    (1, S*D) array (see flatten_pe).  Returns (B, S, D)."""
    B, S, D = x.shape
    C = S * D

    # Lane-dense 2D views: x -> (B, S*D), pe -> (1, S*D) broadcast over rows.
    x2 = x.reshape(B, C)
    if pe.ndim == 2 and pe.shape != (1, C):
        pe2 = pe[:S, :].reshape(1, C).astype(x.dtype)   # self.pe[:, :x.shape[1], :]
    else:
        pe2 = pe.reshape(1, C).astype(x.dtype)

    if block_budget_bytes is None:
        block_budget_bytes = _block_budget_bytes()
    itemsize = jnp.dtype(x.dtype).itemsize
    tile_b, tile_c = _choose_tiles(B, C, x.dtype, block_budget_bytes)
    num_b = pl.cdiv(B, tile_b)
    num_c = pl.cdiv(C, tile_c)

    # pe block index depends only on the OUTER grid axis -> Pallas keeps it
    # resident in VMEM across the inner (row/batch) iterations.
    x_spec = pl.BlockSpec((tile_b, tile_c), lambda c, b: (b, c))
    pe_spec = pl.BlockSpec((1, tile_c), lambda c, b: (0, c))
    out_spec = pl.BlockSpec((tile_b, tile_c), lambda c, b: (b, c))
    out_shape = jax.ShapeDtypeStruct((B, C), x.dtype)

    use_dropout = bool(training) and float(dropout_p) > 0.0
    assert 0.0 <= float(dropout_p) < 1.0, "dropout_p must be in [0, 1)"

    # Explicit VMEM budget: double-buffered streamed tiles + pe + headroom.
    n_stream_blocks = 3 if use_dropout else 2          # x(+mask) in, out
    block_bytes = tile_b * tile_c * itemsize
    pe_bytes = tile_c * itemsize
    vmem_limit = int(2 * (n_stream_blocks * block_bytes + pe_bytes)) + (2 << 20)

    compiler_params = pltpu.CompilerParams(
        dimension_semantics=("parallel", "parallel"),
        vmem_limit_bytes=vmem_limit)

    io_aliases = {0: 0} if donate_x else {}

    if not use_dropout:
        # Eval mode (or p == 0): dropout is the identity.
        out2 = pl.pallas_call(
            _pe_add_kernel,
            out_shape=out_shape,
            grid_spec=pltpu.PrefetchScalarGridSpec(
                num_scalar_prefetch=0,
                grid=(num_c, num_b),
                in_specs=[x_spec, pe_spec],
                out_specs=out_spec),
            compiler_params=compiler_params,
            input_output_aliases=io_aliases,
        )(x2, pe2)
        return out2.reshape(B, S, D)

    # Training mode: inverted dropout.  Mask is built with jax.random (not the
    # on-chip PRNG) so it runs in interpret mode and is tiling-invariant.
    # TODO(synk): dropout RNG stream differs from torch's nn.Dropout.
    if rng_key is None:
        rng_key = jax.random.PRNGKey(0)
    p = float(dropout_p)
    keep = jax.random.bernoulli(rng_key, 1.0 - p, (B, C))
    m2 = keep.astype(x.dtype) * jnp.asarray(1.0 / (1.0 - p), dtype=x.dtype)

    m_spec = pl.BlockSpec((tile_b, tile_c), lambda c, b: (b, c))
    out2 = pl.pallas_call(
        _pe_add_dropout_kernel,
        out_shape=out_shape,
        grid_spec=pltpu.PrefetchScalarGridSpec(
            num_scalar_prefetch=0,
            grid=(num_c, num_b),
            in_specs=[x_spec, pe_spec, m_spec],
            out_specs=out_spec),
        compiler_params=compiler_params,
        input_output_aliases=io_aliases,
    )(x2, pe2, m2)
    return out2.reshape(B, S, D)


# ----------------------------------------------------------------------------
# Demo
# ----------------------------------------------------------------------------
if __name__ == "__main__":
    d_model = 32
    seq_length = 8
    batch = 2
    dropout_p = 0.1

    key = jax.random.PRNGKey(0)
    k_x, k_drop, k_x2 = jax.random.split(key, 3)
    x = jax.random.normal(k_x, (batch, seq_length, d_model), dtype=jnp.float32)

    pe = make_positional_encoding(seq_length, d_model)
    pe_flat = flatten_pe(pe, seq_length, jnp.float32)   # precompute once

    # Eval-mode forward (dropout = identity).
    out = positional_encoding_forward(x, pe_flat, dropout_p=dropout_p,
                                      training=False)
    out = jax.block_until_ready(out)

    ref = x + pe[None, :seq_length, :]
    assert out.shape == (batch, seq_length, d_model)
    assert jnp.allclose(out, ref, atol=1e-6), "mismatch vs reference (eval)"

    # Eval-mode forward on a non-aligned shape (exercises full-extent blocks).
    x_odd = jax.random.normal(k_x2, (3, 5, 18), dtype=jnp.float32)
    pe_odd = make_positional_encoding(5, 18)
    out_odd = jax.block_until_ready(
        positional_encoding_forward(x_odd, pe_odd, training=False))
    assert jnp.allclose(out_odd, x_odd + pe_odd[None, :, :], atol=1e-6), \
        "mismatch vs reference (unaligned shape)"

    # Training-mode dropout: every element must be 0 (dropped) or
    # (x + pe) / (1 - p) (kept).
    out_train = positional_encoding_forward(
        x, pe_flat, dropout_p=dropout_p, training=True, rng_key=k_drop)
    out_train = jax.block_until_ready(out_train)
    scaled = ref / (1.0 - dropout_p)
    ok = (jnp.isclose(out_train, 0.0, atol=1e-6) |
          jnp.isclose(out_train, scaled, atol=1e-5, rtol=1e-5))
    assert bool(jnp.all(ok)), "training-mode dropout output inconsistent"

    print("KERNEL_OK")
</pallas_src>

<mosaic_0001>
module attributes {stable_mosaic.version = 11 : i64} {
  func.func @_pe_add_kernel(%arg0: i32, %arg1: i32, %arg2: memref<2x256xf32, #tpu.memory_space<vmem>>, %arg3: memref<1x256xf32, #tpu.memory_space<vmem>>, %arg4: memref<2x256xf32, #tpu.memory_space<vmem>>) attributes {dimension_semantics = [#tpu.dimension_semantics<parallel>, #tpu.dimension_semantics<parallel>], iteration_bounds = array<i64: 1, 1>, scalar_prefetch = 0 : i64, scratch_operands = 0 : i64, tpu.core_type = #tpu.core_type<tc>, window_params = [{transform_indices = @transform_0, window_bounds = array<i64: 2, 256>}, {transform_indices = @transform_1, window_bounds = array<i64: 1, 256>}, {transform_indices = @transform_2, window_bounds = array<i64: 2, 256>}]} {
    %c0 = arith.constant 0 : index
    %c0_0 = arith.constant 0 : index
    %0 = vector.load %arg2[%c0, %c0_0] : memref<2x256xf32, #tpu.memory_space<vmem>>, vector<2x256xf32>
    %c0_1 = arith.constant 0 : index
    %c0_2 = arith.constant 0 : index
    %1 = vector.load %arg3[%c0_1, %c0_2] : memref<1x256xf32, #tpu.memory_space<vmem>>, vector<1x256xf32>
    %2 = vector.broadcast %1 : vector<1x256xf32> to vector<2x256xf32>
    %3 = arith.addf %0, %2 : vector<2x256xf32>
    %c0_3 = arith.constant 0 : index
    %c0_4 = arith.constant 0 : index
    %4 = vector.load %arg4[%c0_3, %c0_4] : memref<2x256xf32, #tpu.memory_space<vmem>>, vector<2x256xf32>
    tpu.vector_store %arg4[%c0_3, %c0_4], %3 {strides = array<i32>} : memref<2x256xf32, #tpu.memory_space<vmem>>, vector<2x256xf32>,
    return
  }
  func.func @transform_0(%arg0: i32, %arg1: i32) -> (i32, i32) {
    %c0_i32 = arith.constant 0 : i32
    return %arg1, %arg0 : i32, i32
  }
  func.func @transform_1(%arg0: i32, %arg1: i32) -> (i32, i32) {
    %c0_i32 = arith.constant 0 : i32
    %c0_i32_0 = arith.constant 0 : i32
    return %c0_i32, %arg0 : i32, i32
  }
  func.func @transform_2(%arg0: i32, %arg1: i32) -> (i32, i32) {
    %c0_i32 = arith.constant 0 : i32
    return %arg1, %arg0 : i32, i32
  }
}

</mosaic_0001>

<llo_original>
// kernel: tpu_custom_call.1
$region0: #{tpu_custom_call.1}
  #allocation0 [shape = 'u32[]', space=smem, size = 0x4, offset = 0x4, fixed_abs, tag = 'smem constant byte address 0x4 - core index']
  #allocation1 [shape = 'u32[144,128]{1,0:T(1,128)}', space=vmem, size = 0x12000, scoped, tag = 'internal scratch']
  %s0 = inlined_call_operand.hbm [shape: f32[2,256], index: 0, kind: input, shape index: {}]
  %s1 = inlined_call_operand.vmem [shape: f32[1,256], index: 1, kind: input, shape index: {}]
  %s2 = inlined_call_operand.hbm [shape: f32[2,256], index: 2, kind: output, shape index: {}]
  %s3 = sld [smem:[#allocation0]]
  $region22: #{tpu_custom_call.1} parent=0
    _
  %s5 = ssub.s32 1, %s3
  %s6 = scalar_select 0, %s5, %s3
  $region1: #{tpu_custom_call.1} parent=0
    #allocation2 [shape = 'u8[2048]{0}', space=vmem, size = 0x800, scoped, tag = 'input window, operand 0, single buffered']
    #allocation3 [shape = 's32[1]{0}', space=sflag, size = 0x4, scoped, tag = 'scoped memory for tpu_custom_call.1']
    #allocation4 [shape = 's32[1]{0}', space=sflag, size = 0x4, scoped, tag = 'scoped memory for tpu_custom_call.1']
    #allocation5 [shape = 'u8[2048]{0}', space=vmem, size = 0x800, scoped, tag = 'output window, operand 0, single buffered']
    %7 = vsyncpa [#allocation3], 0
    %8 = vsyncpa [#allocation4], 0
    // Predicated region
    $region2: #{tpu_custom_call.1} parent=1 // pred_check
      _
    $region3: #{tpu_custom_call.1} parent=1 // pred_check_branch
      %10 = sbr.rel (0) target = $region5
    $region4: #{tpu_custom_call.1} parent=1 // pred_region
      %s12 = ssub.s32 64, 64
      %13 = vsyncadd [#allocation3], %s12
      %s15 = sshll.u32 [#allocation2], 4
      %s16 = int_to_ptr.vmem [resolvable:$true] %s15
      %18 = dma.hbm_to_vmem [thread:$0]  %s0, 64, %s16, [#allocation3]
    $region5: #{tpu_custom_call.1} parent=1 // pred_fallthru
      _
    // Predicated region
    $region6: #{tpu_custom_call.1} parent=1 // pred_check
      _
    $region7: #{tpu_custom_call.1} parent=1 // pred_check_branch
      %20 = sbr.rel (0) target = $region9
    $region8: #{tpu_custom_call.1} parent=1 // pred_region
      _
    $region9: #{tpu_custom_call.1} parent=1 // pred_fallthru
      _
    // Predicated region
    $region10: #{tpu_custom_call.1} parent=1 // pred_check
      _
    $region11: #{tpu_custom_call.1} parent=1 // pred_check_branch
      %22 = sbr.rel (0) target = $region13
    $region12: #{tpu_custom_call.1} parent=1 // pred_region
      %23 = dma.done [#allocation3], 64
    $region13: #{tpu_custom_call.1} parent=1 // pred_fallthru
      _
    %v24 = vld [vmem:[#allocation2] sm:$0xf]
    %v25 = vld [vmem:[%s1] sm:$0x3]
    %v27 = vlaneseq
    %v28 = vshrl.u32 %v27, 7
    %v29 = vsub.s32 0, %v28
    %v30 = vrot.slane %v25, %v29
    %v31 = vlaneseq
    %v32 = vshrl.u32 %v31, 7
    %v33 = vsub.s32 1, %v32
    %v34 = vrot.slane %v25, %v33
    %v35 = vcombine.low %v30, %v34
    %v37 = vunpack.c.l.s4 1983009808
    %v38 = vunpack.c.0.s8 %v37
    %v39 = vlaneseq
    %v40 = vshrl.u32 %v39, 7
    %v41 = vsub.s32 %v38, %v40
    %v42 = vrot.slane %v35, %v41
    %v44 = vadd.f32 %v24, %v42
    %45 = vst [vmem:[#allocation5] sm:$0xf] %v44
    // Predicated region
    $region14: #{tpu_custom_call.1} parent=1 // pred_check
      _
    $region15: #{tpu_custom_call.1} parent=1 // pred_check_branch
      %47 = sbr.rel (0) target = $region17
    $region16: #{tpu_custom_call.1} parent=1 // pred_region
      %s49 = ssub.s32 64, 64
      %50 = vsyncadd [#allocation4], %s49
      %s52 = sshll.u32 [#allocation5], 4
      %s53 = int_to_ptr.vmem [resolvable:$true] %s52
      %55 = dma.vmem_to_hbm [thread:$0]  %s53, 64, %s2, [#allocation4]
    $region17: #{tpu_custom_call.1} parent=1 // pred_fallthru
      _
    // Predicated region
    $region18: #{tpu_custom_call.1} parent=1 // pred_check
      _
    $region19: #{tpu_custom_call.1} parent=1 // pred_check_branch
      %57 = sbr.rel (0) target = $region21
    $region20: #{tpu_custom_call.1} parent=1 // pred_region
      %58 = dma.done [#allocation4], 64
    $region21: #{tpu_custom_call.1} parent=1 // pred_fallthru
      _
    %59 = vsyncpa [#allocation3], 1
    %60 = vsyncpa [#allocation4], 1

</llo_original>
